<compile_context>
chip_gen: v6e
topology: v6e:2x2x1
jax: 0.10.0
libtpu: 0.0.40
codegen_flags: <defaults>
</compile_context>

<pallas_src>
import jax
import jax.numpy as jnp
from jax.experimental import pallas as pl
from jax.experimental.pallas import tpu as pltpu


def _round_up(x, m):
    return ((x + m - 1) // m) * m


def _sublane_multiple(dtype):
    itemsize = jnp.dtype(dtype).itemsize
    return {4: 8, 2: 16, 1: 32}.get(itemsize, 8)


def _poincare_kernel(u_ref, v_ref, bp_ref, out_ref):
    # u_ref / v_ref / bp_ref: (TB, D) tiles in their storage dtype.
    u = u_ref[...].astype(jnp.float32)
    v = v_ref[...].astype(jnp.float32)
    bp = bp_ref[...].astype(jnp.float32)

    dot_uv = jnp.sum(u * v, axis=-1, keepdims=True)        # (TB, 1)
    sq_norm = jnp.sum(bp * bp, axis=-1, keepdims=True)     # (TB, 1)

    # NOTE: result blows up as ||base_point|| -> 1 (that is the math);
    # base points must lie strictly inside the Poincare ball.
    one_minus = 1.0 - sq_norm
    denom = one_minus * one_minus
    out_ref[...] = (4.0 * dot_uv) * pl.reciprocal(denom, approx=False)


def _choose_batch_tile(B, D, itemsize, sub, *, max_batch_tile=2048,
                       vmem_input_budget=12 * 1024 * 1024, min_steps=4):
    # 3 inputs x 2 pipeline buffers per grid step.
    per_row_bytes = 6 * D * itemsize
    tb_cap = max(sub, (vmem_input_budget // per_row_bytes) // sub * sub)
    tb = min(max_batch_tile, tb_cap, _round_up(B, sub))
    if B > min_steps * sub:
        # Keep >= min_steps grid steps so the "parallel" batch axis can
        # actually shard across both TensorCores on v7x (harmless elsewhere).
        tb = min(tb, _round_up(-(-B // min_steps), sub))
    tb = max(sub, (tb // sub) * sub)
    return tb


def _poincare_batched_pallas(u, v, base_point):
    """u, v, base_point: (B, D) arrays.  Returns (B,) float32."""
    B, D = u.shape

    # Keep low-precision float inputs in their storage dtype (cast in-kernel);
    # anything else is promoted to f32 in the wrapper.
    if u.dtype not in (jnp.float32, jnp.bfloat16, jnp.float16):
        u = u.astype(jnp.float32)
        v = v.astype(jnp.float32)
        base_point = base_point.astype(jnp.float32)
    dtype = u.dtype
    itemsize = jnp.dtype(dtype).itemsize
    sub = _sublane_multiple(dtype)

    TB = _choose_batch_tile(B, D, itemsize, sub)
    Bp = _round_up(B, TB)

    def _pad_batch(x):
        x = x.astype(dtype)
        if Bp == B:
            return x
        # Padded rows: bp == 0 -> denominator 1, dot == 0 -> finite output 0.
        return jnp.pad(x, ((0, Bp - B), (0, 0)))

    row_spec = pl.BlockSpec((TB, D), lambda b: (b, 0))

    out = pl.pallas_call(
        _poincare_kernel,
        out_shape=jax.ShapeDtypeStruct((Bp, 1), jnp.float32),
        grid_spec=pltpu.PrefetchScalarGridSpec(
            num_scalar_prefetch=0,
            grid=(Bp // TB,),
            in_specs=[row_spec, row_spec, row_spec],
            out_specs=pl.BlockSpec((TB, 1), lambda b: (b, 0)),
        ),
        compiler_params=pltpu.CompilerParams(
            dimension_semantics=("parallel",),
            vmem_limit_bytes=32 * 1024 * 1024,
        ),
    )(_pad_batch(u), _pad_batch(v), _pad_batch(base_point))
    return out[:B, 0]


def _poincare_batched_small(u, v, base_point):
    """Fused-XLA fallback for tiny problems (launch/pad overhead dominates)."""
    u = u.astype(jnp.float32)
    v = v.astype(jnp.float32)
    bp = base_point.astype(jnp.float32)
    dot_uv = jnp.sum(u * v, axis=-1)
    sq_norm = jnp.sum(bp * bp, axis=-1)
    return 4.0 * dot_uv / (1.0 - sq_norm) ** 2


def poincare_metric_forward(u, v, base_point, *, min_pallas_elems=65536):
    """PoincareMetric.forward.

    1-D inputs (length D)  -> scalar (matches torch.dot semantics).
    2-D inputs (B, D)      -> (B,) vector (batched evaluation).
    """
    single = u.ndim == 1
    if single:
        u, v, base_point = u[None, :], v[None, :], base_point[None, :]
    assert u.ndim == 2 and v.shape == u.shape and base_point.shape == u.shape

    B, D = u.shape
    if B * D < min_pallas_elems:
        out = _poincare_batched_small(u, v, base_point)
    else:
        out = _poincare_batched_pallas(u, v, base_point)
    return out[0] if single else out


# TODO(synk): get_metric_tensor / get_christoffels (float64 matrix inverse +
# torch.autograd loops) are not ported; only the forward metric is a kernel.


def _reference(u, v, base_point):
    u = u.astype(jnp.float32)
    v = v.astype(jnp.float32)
    bp = base_point.astype(jnp.float32)
    return 4.0 * jnp.sum(u * v, axis=-1) / (
        1.0 - jnp.sum(bp * bp, axis=-1)
    ) ** 2


if __name__ == "__main__":
    key = jax.random.PRNGKey(0)
    k_u, k_v, k_bp = jax.random.split(key, 3)

    # ---- Pallas path: batch big enough to exceed the small-problem cutoff.
    B, D = 2048, 64
    u = jax.random.normal(k_u, (B, D), dtype=jnp.float32)
    v = jax.random.normal(k_v, (B, D), dtype=jnp.float32)
    bp_raw = jax.random.normal(k_bp, (B, D), dtype=jnp.float32)
    base_point = 0.3 * bp_raw / jnp.linalg.norm(bp_raw, axis=-1, keepdims=True)

    out_b = jax.block_until_ready(poincare_metric_forward(u, v, base_point))
    ref_b = _reference(u, v, base_point)
    assert out_b.shape == (B,)
    assert jnp.allclose(out_b, ref_b, rtol=1e-5, atol=1e-5), (out_b[:4], ref_b[:4])

    # ---- Pallas kernel also exercised directly on a tiny padded batch.
    out_tiny = jax.block_until_ready(
        _poincare_batched_pallas(u[:4, :32], v[:4, :32], base_point[:4, :32])
    )
    ref_tiny = _reference(u[:4, :32], v[:4, :32], base_point[:4, :32])
    assert jnp.allclose(out_tiny, ref_tiny, rtol=1e-5, atol=1e-5), (out_tiny, ref_tiny)

    # ---- Small-problem fallback path through the public wrapper.
    out_small = jax.block_until_ready(
        poincare_metric_forward(u[:4, :32], v[:4, :32], base_point[:4, :32])
    )
    assert jnp.allclose(out_small, ref_tiny, rtol=1e-5, atol=1e-5)

    # ---- Single-vector path (original 1-D forward semantics).
    out_s = jax.block_until_ready(
        poincare_metric_forward(u[0], v[0], base_point[0])
    )
    ref_s = 4.0 * jnp.dot(u[0], v[0]) / (
        1.0 - jnp.linalg.norm(base_point[0]) ** 2
    ) ** 2
    assert jnp.allclose(out_s, ref_s, rtol=1e-5, atol=1e-5), (out_s, ref_s)

    print("KERNEL_OK")
</pallas_src>

<mosaic_0001>
module attributes {stable_mosaic.version = 11 : i64} {
  func.func @_poincare_kernel(%arg0: i32, %arg1: memref<512x64xf32, #tpu.memory_space<vmem>>, %arg2: memref<512x64xf32, #tpu.memory_space<vmem>>, %arg3: memref<512x64xf32, #tpu.memory_space<vmem>>, %arg4: memref<512x1xf32, #tpu.memory_space<vmem>>) attributes {dimension_semantics = [#tpu.dimension_semantics<parallel>], iteration_bounds = array<i64: 4>, scalar_prefetch = 0 : i64, scratch_operands = 0 : i64, tpu.core_type = #tpu.core_type<tc>, window_params = [{transform_indices = @transform_0, window_bounds = array<i64: 512, 64>}, {transform_indices = @transform_1, window_bounds = array<i64: 512, 64>}, {transform_indices = @transform_2, window_bounds = array<i64: 512, 64>}, {transform_indices = @transform_3, window_bounds = array<i64: 512, 1>}]} {
    %c0 = arith.constant 0 : index
    %c0_0 = arith.constant 0 : index
    %0 = vector.load %arg1[%c0, %c0_0] : memref<512x64xf32, #tpu.memory_space<vmem>>, vector<512x64xf32>
    %c0_1 = arith.constant 0 : index
    %c0_2 = arith.constant 0 : index
    %1 = vector.load %arg2[%c0_1, %c0_2] : memref<512x64xf32, #tpu.memory_space<vmem>>, vector<512x64xf32>
    %c0_3 = arith.constant 0 : index
    %c0_4 = arith.constant 0 : index
    %2 = vector.load %arg3[%c0_3, %c0_4] : memref<512x64xf32, #tpu.memory_space<vmem>>, vector<512x64xf32>
    %3 = arith.mulf %0, %1 : vector<512x64xf32>
    %cst = arith.constant dense<0.000000e+00> : vector<512xf32>
    %4 = vector.multi_reduction <add>, %3, %cst [1] : vector<512x64xf32> to vector<512xf32>
    %5 = vector.shape_cast %4 : vector<512xf32> to vector<512x1xf32>
    %6 = arith.mulf %2, %2 : vector<512x64xf32>
    %cst_5 = arith.constant dense<0.000000e+00> : vector<512xf32>
    %7 = vector.multi_reduction <add>, %6, %cst_5 [1] : vector<512x64xf32> to vector<512xf32>
    %8 = vector.shape_cast %7 : vector<512xf32> to vector<512x1xf32>
    %cst_6 = arith.constant 1.000000e+00 : f32
    %9 = vector.broadcast %cst_6 : f32 to vector<512x1xf32>
    %10 = arith.subf %9, %8 : vector<512x1xf32>
    %11 = arith.mulf %10, %10 : vector<512x1xf32>
    %cst_7 = arith.constant 4.000000e+00 : f32
    %12 = vector.broadcast %cst_7 : f32 to vector<512x1xf32>
    %13 = arith.mulf %12, %5 : vector<512x1xf32>
    %14 = tpu.reciprocal %11 : vector<512x1xf32> -> vector<512x1xf32>
    %15 = arith.mulf %13, %14 : vector<512x1xf32>
    %c0_8 = arith.constant 0 : index
    %c0_9 = arith.constant 0 : index
    %16 = vector.load %arg4[%c0_8, %c0_9] : memref<512x1xf32, #tpu.memory_space<vmem>>, vector<512x1xf32>
    tpu.vector_store %arg4[%c0_8, %c0_9], %15 {strides = array<i32>} : memref<512x1xf32, #tpu.memory_space<vmem>>, vector<512x1xf32>,
    return
  }
  func.func @transform_0(%arg0: i32) -> (i32, i32) {
    %c0_i32 = arith.constant 0 : i32
    %c0_i32_0 = arith.constant 0 : i32
    return %arg0, %c0_i32 : i32, i32
  }
  func.func @transform_1(%arg0: i32) -> (i32, i32) {
    %c0_i32 = arith.constant 0 : i32
    %c0_i32_0 = arith.constant 0 : i32
    return %arg0, %c0_i32 : i32, i32
  }
  func.func @transform_2(%arg0: i32) -> (i32, i32) {
    %c0_i32 = arith.constant 0 : i32
    %c0_i32_0 = arith.constant 0 : i32
    return %arg0, %c0_i32 : i32, i32
  }
  func.func @transform_3(%arg0: i32) -> (i32, i32) {
    %c0_i32 = arith.constant 0 : i32
    %c0_i32_0 = arith.constant 0 : i32
    return %arg0, %c0_i32 : i32, i32
  }
}

</mosaic_0001>

<llo_original>
// kernel: tpu_custom_call.1
$region0: #{tpu_custom_call.1}
  #allocation0 [shape = 'u32[]', space=smem, size = 0x4, offset = 0x4, fixed_abs, tag = 'smem constant byte address 0x4 - core index']
  #allocation1 [shape = 'u32[144,128]{1,0:T(1,128)}', space=vmem, size = 0x12000, scoped, tag = 'internal scratch']
  %s0 = inlined_call_operand.vmem [shape: f32[2048,64], index: 0, kind: input, shape index: {}]
  %s1 = inlined_call_operand.vmem [shape: f32[2048,64], index: 1, kind: input, shape index: {}]
  %s2 = inlined_call_operand.vmem [shape: f32[2048,64], index: 2, kind: input, shape index: {}]
  %s3 = inlined_call_operand.vmem [shape: f32[2048,1], index: 3, kind: output, shape index: {}]
  %s4 = sld [smem:[#allocation0]]
  $region45: #{tpu_custom_call.1} parent=0
    _
  %s6 = ssub.s32 1, %s4
  %s7 = scalar_select 0, %s6, %s4
  loop: start=0, step=1, limit=6
  $region2: #{tpu_custom_call.1} parent=0 // loop_pre_header
    _
  $region3: #{tpu_custom_call.1} parent=0 // loop_header
    %s9 = sphi 0, %s13
    %p10 = scmp.ge.s32.totalorder %s9, 6
    %s19 = sphi 0, %s21
    %s22 = sphi 0, %s19
    %s23 = sphi 0, %s22
    %s39 = sphi 0, %s23
    %s45 = sphi 0, %s47
    %s48 = sphi 0, %s45
    %s49 = sphi 0, %s48
    %s65 = sphi 0, %s49
    %s71 = sphi 0, %s73
    %s74 = sphi 0, %s71
    %s75 = sphi 0, %s74
    %s91 = sphi 0, %s75
    %s97 = sphi 0, %s99
    %s100 = sphi 0, %s97
    %s101 = sphi 0, %s100
    %s117 = sphi 0, %s101
  $region4: #{tpu_custom_call.1} parent=0 // loop_header_branch
    %12 = sbr.rel (%p10) target = $region8
  $region5: #{tpu_custom_call.1} parent=0 // loop_body
    %s14 = ssub.s32 %s9, 1
    %s15 = ssub.s32 %s9, 2
    %s16 = sadd.s32 %s9, 1
    %s17 = ssub.s32 %s9, %s16
    %p18 = scmp.eq.s32.totalorder %s17, 0
    %s20 = sadd.s32 %s19, 1
    %s21 = scalar_select %p18, %s19, %s20
    %p24 = pneg %p18
    %p25 = scmp.eq.s32.totalorder %s9, 3
    %p26 = por %p24, %p25
    %p27 = scmp.ne.s32.totalorder %s19, %s22
    %p28 = scmp.eq.s32.totalorder %s9, 0
    %p29 = por %p27, %p28
    %p30 = scmp.ne.s32.totalorder %s19, %s22
    %p31 = scmp.eq.s32.totalorder %s14, 3
    %p32 = por %p30, %p31
    %p33 = scmp.ne.s32.totalorder %s22, %s23
    %p34 = scmp.eq.s32.totalorder %s14, 0
    %p35 = por %p33, %p34
    %p36 = scmp.ne.s32.totalorder %s22, %s23
    %p37 = scmp.eq.s32.totalorder %s15, 3
    %p38 = por %p36, %p37
    %p40 = scmp.ne.s32.totalorder %s23, %s39
    %p41 = scmp.eq.s32.totalorder %s15, 0
    %p42 = por %p40, %p41
    %s43 = ssub.s32 %s9, %s16
    %p44 = scmp.eq.s32.totalorder %s43, 0
    %s46 = sadd.s32 %s45, 1
    %s47 = scalar_select %p44, %s45, %s46
    %p50 = pneg %p44
    %p51 = scmp.eq.s32.totalorder %s9, 3
    %p52 = por %p50, %p51
    %p53 = scmp.ne.s32.totalorder %s45, %s48
    %p54 = scmp.eq.s32.totalorder %s9, 0
    %p55 = por %p53, %p54
    %p56 = scmp.ne.s32.totalorder %s45, %s48
    %p57 = scmp.eq.s32.totalorder %s14, 3
    %p58 = por %p56, %p57
    %p59 = scmp.ne.s32.totalorder %s48, %s49
    %p60 = scmp.eq.s32.totalorder %s14, 0
    %p61 = por %p59, %p60
    %p62 = scmp.ne.s32.totalorder %s48, %s49
    %p63 = scmp.eq.s32.totalorder %s15, 3
    %p64 = por %p62, %p63
    %p66 = scmp.ne.s32.totalorder %s49, %s65
    %p67 = scmp.eq.s32.totalorder %s15, 0
    %p68 = por %p66, %p67
    %s69 = ssub.s32 %s9, %s16
    %p70 = scmp.eq.s32.totalorder %s69, 0
    %s72 = sadd.s32 %s71, 1
    %s73 = scalar_select %p70, %s71, %s72
    %p76 = pneg %p70
    %p77 = scmp.eq.s32.totalorder %s9, 3
    %p78 = por %p76, %p77
    %p79 = scmp.ne.s32.totalorder %s71, %s74
    %p80 = scmp.eq.s32.totalorder %s9, 0
    %p81 = por %p79, %p80
    %p82 = scmp.ne.s32.totalorder %s71, %s74
    %p83 = scmp.eq.s32.totalorder %s14, 3
    %p84 = por %p82, %p83
    %p85 = scmp.ne.s32.totalorder %s74, %s75
    %p86 = scmp.eq.s32.totalorder %s14, 0
    %p87 = por %p85, %p86
    %p88 = scmp.ne.s32.totalorder %s74, %s75
    %p89 = scmp.eq.s32.totalorder %s15, 3
    %p90 = por %p88, %p89
    %p92 = scmp.ne.s32.totalorder %s75, %s91
    %p93 = scmp.eq.s32.totalorder %s15, 0
    %p94 = por %p92, %p93
    %s95 = ssub.s32 %s9, %s16
    %p96 = scmp.eq.s32.totalorder %s95, 0
    %s98 = sadd.s32 %s97, 1
    %s99 = scalar_select %p96, %s97, %s98
    %p102 = pneg %p96
    %p103 = scmp.eq.s32.totalorder %s9, 3
    %p104 = por %p102, %p103
    %p105 = scmp.ne.s32.totalorder %s97, %s100
    %p106 = scmp.eq.s32.totalorder %s9, 0
    %p107 = por %p105, %p106
    %p108 = scmp.ne.s32.totalorder %s97, %s100
    %p109 = scmp.eq.s32.totalorder %s14, 3
    %p110 = por %p108, %p109
    %p111 = scmp.ne.s32.totalorder %s100, %s101
    %p112 = scmp.eq.s32.totalorder %s14, 0
    %p113 = por %p111, %p112
    %p114 = scmp.ne.s32.totalorder %s100, %s101
    %p115 = scmp.eq.s32.totalorder %s15, 3
    %p116 = por %p114, %p115
    %p118 = scmp.ne.s32.totalorder %s101, %s117
    %p119 = scmp.eq.s32.totalorder %s15, 0
    %p120 = por %p118, %p119
    %p121 = scmp.le.s32.totalorder 1, %s9
    %p122 = scmp.lt.s32.totalorder %s9, 5
    %p123 = pnand %p121, %p122
    %p124 = pneg %p123
    // Predicated region
    $region9: #{tpu_custom_call.1} parent=5 // pred_check
      _
    $region10: #{tpu_custom_call.1} parent=5 // pred_check_branch
      %126 = sbr.rel (%p123) target = $region12
    $region11: #{tpu_custom_call.1} parent=5 // pred_region
      %s127 = ssub.s32 %s9, 1
    $region12: #{tpu_custom_call.1} parent=5 // pred_fallthru
      _
    %p128 = scmp.lt.s32.totalorder %s9, 4
    // Predicated region
    $region13: #{tpu_custom_call.1} parent=5 // pred_check
      %p129 = pneg %p128
    $region14: #{tpu_custom_call.1} parent=5 // pred_check_branch
      %131 = sbr.rel (%p129) target = $region16
    $region15: #{tpu_custom_call.1} parent=5 // pred_region
      // Predicated region
      $region17: #{tpu_custom_call.1} parent=15 // pred_check
        %p132 = pneg %p29
      $region18: #{tpu_custom_call.1} parent=15 // pred_check_branch
        %134 = sbr.rel (%p132) target = $region20
      $region19: #{tpu_custom_call.1} parent=15 // pred_region
        %s135 = smul.u32 64, %s9
        %p136 = scmp.lt.s32.totalorder %s135, 255
        %s137 = scalar_select %p136, %s135, 255
        %s138 = smul.addr %s137, 8
        %s139 = scalar_lea.vmem %s0, %s138
        %s140 = smul.u32 64, %s9
      $region20: #{tpu_custom_call.1} parent=15 // pred_fallthru
        _
      // Predicated region
      $region21: #{tpu_custom_call.1} parent=15 // pred_check
        %p141 = pneg %p55
      $region22: #{tpu_custom_call.1} parent=15 // pred_check_branch
        %143 = sbr.rel (%p141) target = $region24
      $region23: #{tpu_custom_call.1} parent=15 // pred_region
        %s144 = smul.u32 64, %s9
        %p145 = scmp.lt.s32.totalorder %s144, 255
        %s146 = scalar_select %p145, %s144, 255
        %s147 = smul.addr %s146, 8
        %s148 = scalar_lea.vmem %s1, %s147
        %s149 = smul.u32 64, %s9
      $region24: #{tpu_custom_call.1} parent=15 // pred_fallthru
        _
      // Predicated region
      $region25: #{tpu_custom_call.1} parent=15 // pred_check
        %p150 = pneg %p81
      $region26: #{tpu_custom_call.1} parent=15 // pred_check_branch
        %152 = sbr.rel (%p150) target = $region28
      $region27: #{tpu_custom_call.1} parent=15 // pred_region
        %s153 = smul.u32 64, %s9
        %p154 = scmp.lt.s32.totalorder %s153, 255
        %s155 = scalar_select %p154, %s153, 255
        %s156 = smul.addr %s155, 8
        %s157 = scalar_lea.vmem %s2, %s156
        %s158 = smul.u32 64, %s9
      $region28: #{tpu_custom_call.1} parent=15 // pred_fallthru
        _
    $region16: #{tpu_custom_call.1} parent=5 // pred_fallthru
      _
    %p159 = scmp.le.s32.totalorder 1, %s9
    %p160 = scmp.lt.s32.totalorder %s9, 5
    %p161 = pnand %p159, %p160
    %p162 = pneg %p161
    // Predicated region
    $region29: #{tpu_custom_call.1} parent=5 // pred_check
      _
    $region30: #{tpu_custom_call.1} parent=5 // pred_check_branch
      %164 = sbr.rel (%p161) target = $region32
    $region31: #{tpu_custom_call.1} parent=5 // pred_region
      %s165 = ssub.s32 %s9, 1
      %s166 = smul.u32 64, %s14
      %p167 = scmp.lt.s32.totalorder %s166, 255
      %s168 = scalar_select %p167, %s166, 255
      %s169 = smul.addr %s168, 8
      %s170 = scalar_lea.vmem %s0, %s169
      %p171 = pneg %p35
      %p172 = pneg %p32
      %s173 = smul.u32 64, %s14
      %p174 = scmp.lt.s32.totalorder %s173, 255
      %s175 = scalar_select %p174, %s173, 255
      %s176 = smul.addr %s175, 8
      %s177 = scalar_lea.vmem %s1, %s176
      %p178 = pneg %p61
      %p179 = pneg %p58
      %s180 = smul.u32 64, %s14
      %p181 = scmp.lt.s32.totalorder %s180, 255
      %s182 = scalar_select %p181, %s180, 255
      %s183 = smul.addr %s182, 8
      %s184 = scalar_lea.vmem %s2, %s183
      %p185 = pneg %p87
      %p186 = pneg %p84
      %p187 = pneg %p113
      %p188 = pneg %p110
      %s189 = smul.u32 64, %s14
      %p190 = scmp.lt.s32.totalorder %s189, 255
      %s191 = scalar_select %p190, %s189, 255
      %s192 = smul.addr %s191, 8
      %s193 = scalar_lea.vmem %s3, %s192
      %s194 = smul.u32 64, %s14
      %p195 = scmp.lt.s32.totalorder %s194, 255
      %s196 = scalar_select %p195, %s194, 255
      %s197 = smul.addr %s196, 8
      %s198 = scalar_lea.vmem %s0, %s197
      %s199 = smul.u32 64, %s14
      %s200 = smul.u32 64, %s14
      %p201 = scmp.lt.s32.totalorder %s200, 255
      %s202 = scalar_select %p201, %s200, 255
      %s203 = smul.addr %s202, 8
      %s204 = scalar_lea.vmem %s1, %s203
      %s205 = smul.u32 64, %s14
      %s206 = smul.u32 64, %s14
      %p207 = scmp.lt.s32.totalorder %s206, 255
      %s208 = scalar_select %p207, %s206, 255
      %s209 = smul.addr %s208, 8
      %s210 = scalar_lea.vmem %s2, %s209
      %s211 = smul.u32 64, %s14
      %s212 = smul.u32 64, %s14
      %p213 = scmp.lt.s32.totalorder %s212, 255
      %s214 = scalar_select %p213, %s212, 255
      %s215 = smul.addr %s214, 8
      %s216 = scalar_lea.vmem %s3, %s215
      %s217 = smul.u32 64, %s14
      %v218 = vld [vmem:[%s198] sm:$0xff]
      %v219 = vld [vmem:[%s198 + $0x8] sm:$0xff]
      %v220 = vld [vmem:[%s198 + $0x10] sm:$0xff]
      %v221 = vld [vmem:[%s198 + $0x18] sm:$0xff]
      %v222 = vld [vmem:[%s198 + $0x20] sm:$0xff]
      %v223 = vld [vmem:[%s198 + $0x28] sm:$0xff]
      %v224 = vld [vmem:[%s198 + $0x30] sm:$0xff]
      %v225 = vld [vmem:[%s198 + $0x38] sm:$0xff]
      %v226 = vld [vmem:[%s198 + $0x40] sm:$0xff]
      %v227 = vld [vmem:[%s198 + $0x48] sm:$0xff]
      %v228 = vld [vmem:[%s198 + $0x50] sm:$0xff]
      %v229 = vld [vmem:[%s198 + $0x58] sm:$0xff]
      %v230 = vld [vmem:[%s198 + $0x60] sm:$0xff]
      %v231 = vld [vmem:[%s198 + $0x68] sm:$0xff]
      %v232 = vld [vmem:[%s198 + $0x70] sm:$0xff]
      %v233 = vld [vmem:[%s198 + $0x78] sm:$0xff]
      %v234 = vld [vmem:[%s198 + $0x80] sm:$0xff]
      %v235 = vld [vmem:[%s198 + $0x88] sm:$0xff]
      %v236 = vld [vmem:[%s198 + $0x90] sm:$0xff]
      %v237 = vld [vmem:[%s198 + $0x98] sm:$0xff]
      %v238 = vld [vmem:[%s198 + $0xa0] sm:$0xff]
      %v239 = vld [vmem:[%s198 + $0xa8] sm:$0xff]
      %v240 = vld [vmem:[%s198 + $0xb0] sm:$0xff]
      %v241 = vld [vmem:[%s198 + $0xb8] sm:$0xff]
      %v242 = vld [vmem:[%s198 + $0xc0] sm:$0xff]
      %v243 = vld [vmem:[%s198 + $0xc8] sm:$0xff]
      %v244 = vld [vmem:[%s198 + $0xd0] sm:$0xff]
      %v245 = vld [vmem:[%s198 + $0xd8] sm:$0xff]
      %v246 = vld [vmem:[%s198 + $0xe0] sm:$0xff]
      %v247 = vld [vmem:[%s198 + $0xe8] sm:$0xff]
      %v248 = vld [vmem:[%s198 + $0xf0] sm:$0xff]
      %v249 = vld [vmem:[%s198 + $0xf8] sm:$0xff]
      %v250 = vld [vmem:[%s198 + $0x100] sm:$0xff]
      %v251 = vld [vmem:[%s198 + $0x108] sm:$0xff]
      %v252 = vld [vmem:[%s198 + $0x110] sm:$0xff]
      %v253 = vld [vmem:[%s198 + $0x118] sm:$0xff]
      %v254 = vld [vmem:[%s198 + $0x120] sm:$0xff]
      %v255 = vld [vmem:[%s198 + $0x128] sm:$0xff]
      %v256 = vld [vmem:[%s198 + $0x130] sm:$0xff]
      %v257 = vld [vmem:[%s198 + $0x138] sm:$0xff]
      %v258 = vld [vmem:[%s198 + $0x140] sm:$0xff]
      %v259 = vld [vmem:[%s198 + $0x148] sm:$0xff]
      %v260 = vld [vmem:[%s198 + $0x150] sm:$0xff]
      %v261 = vld [vmem:[%s198 + $0x158] sm:$0xff]
      %v262 = vld [vmem:[%s198 + $0x160] sm:$0xff]
      %v263 = vld [vmem:[%s198 + $0x168] sm:$0xff]
      %v264 = vld [vmem:[%s198 + $0x170] sm:$0xff]
      %v265 = vld [vmem:[%s198 + $0x178] sm:$0xff]
      %v266 = vld [vmem:[%s198 + $0x180] sm:$0xff]
      %v267 = vld [vmem:[%s198 + $0x188] sm:$0xff]
      %v268 = vld [vmem:[%s198 + $0x190] sm:$0xff]
      %v269 = vld [vmem:[%s198 + $0x198] sm:$0xff]
      %v270 = vld [vmem:[%s198 + $0x1a0] sm:$0xff]
      %v271 = vld [vmem:[%s198 + $0x1a8] sm:$0xff]
      %v272 = vld [vmem:[%s198 + $0x1b0] sm:$0xff]
      %v273 = vld [vmem:[%s198 + $0x1b8] sm:$0xff]
      %v274 = vld [vmem:[%s198 + $0x1c0] sm:$0xff]
      %v275 = vld [vmem:[%s198 + $0x1c8] sm:$0xff]
      %v276 = vld [vmem:[%s198 + $0x1d0] sm:$0xff]
      %v277 = vld [vmem:[%s198 + $0x1d8] sm:$0xff]
      %v278 = vld [vmem:[%s198 + $0x1e0] sm:$0xff]
      %v279 = vld [vmem:[%s198 + $0x1e8] sm:$0xff]
      %v280 = vld [vmem:[%s198 + $0x1f0] sm:$0xff]
      %v281 = vld [vmem:[%s198 + $0x1f8] sm:$0xff]
      %v282 = vld [vmem:[%s204] sm:$0xff]
      %v283 = vld [vmem:[%s204 + $0x8] sm:$0xff]
      %v284 = vld [vmem:[%s204 + $0x10] sm:$0xff]
      %v285 = vld [vmem:[%s204 + $0x18] sm:$0xff]
      %v286 = vld [vmem:[%s204 + $0x20] sm:$0xff]
      %v287 = vld [vmem:[%s204 + $0x28] sm:$0xff]
      %v288 = vld [vmem:[%s204 + $0x30] sm:$0xff]
      %v289 = vld [vmem:[%s204 + $0x38] sm:$0xff]
      %v290 = vld [vmem:[%s204 + $0x40] sm:$0xff]
      %v291 = vld [vmem:[%s204 + $0x48] sm:$0xff]
      %v292 = vld [vmem:[%s204 + $0x50] sm:$0xff]
      %v293 = vld [vmem:[%s204 + $0x58] sm:$0xff]
      %v294 = vld [vmem:[%s204 + $0x60] sm:$0xff]
      %v295 = vld [vmem:[%s204 + $0x68] sm:$0xff]
      %v296 = vld [vmem:[%s204 + $0x70] sm:$0xff]
      %v297 = vld [vmem:[%s204 + $0x78] sm:$0xff]
      %v298 = vld [vmem:[%s204 + $0x80] sm:$0xff]
      %v299 = vld [vmem:[%s204 + $0x88] sm:$0xff]
      %v300 = vld [vmem:[%s204 + $0x90] sm:$0xff]
      %v301 = vld [vmem:[%s204 + $0x98] sm:$0xff]
      %v302 = vld [vmem:[%s204 + $0xa0] sm:$0xff]
      %v303 = vld [vmem:[%s204 + $0xa8] sm:$0xff]
      %v304 = vld [vmem:[%s204 + $0xb0] sm:$0xff]
      %v305 = vld [vmem:[%s204 + $0xb8] sm:$0xff]
      %v306 = vld [vmem:[%s204 + $0xc0] sm:$0xff]
      %v307 = vld [vmem:[%s204 + $0xc8] sm:$0xff]
      %v308 = vld [vmem:[%s204 + $0xd0] sm:$0xff]
      %v309 = vld [vmem:[%s204 + $0xd8] sm:$0xff]
      %v310 = vld [vmem:[%s204 + $0xe0] sm:$0xff]
      %v311 = vld [vmem:[%s204 + $0xe8] sm:$0xff]
      %v312 = vld [vmem:[%s204 + $0xf0] sm:$0xff]
      %v313 = vld [vmem:[%s204 + $0xf8] sm:$0xff]
      %v314 = vld [vmem:[%s204 + $0x100] sm:$0xff]
      %v315 = vld [vmem:[%s204 + $0x108] sm:$0xff]
      %v316 = vld [vmem:[%s204 + $0x110] sm:$0xff]
      %v317 = vld [vmem:[%s204 + $0x118] sm:$0xff]
      %v318 = vld [vmem:[%s204 + $0x120] sm:$0xff]
      %v319 = vld [vmem:[%s204 + $0x128] sm:$0xff]
      %v320 = vld [vmem:[%s204 + $0x130] sm:$0xff]
      %v321 = vld [vmem:[%s204 + $0x138] sm:$0xff]
      %v322 = vld [vmem:[%s204 + $0x140] sm:$0xff]
      %v323 = vld [vmem:[%s204 + $0x148] sm:$0xff]
      %v324 = vld [vmem:[%s204 + $0x150] sm:$0xff]
      %v325 = vld [vmem:[%s204 + $0x158] sm:$0xff]
      %v326 = vld [vmem:[%s204 + $0x160] sm:$0xff]
      %v327 = vld [vmem:[%s204 + $0x168] sm:$0xff]
      %v328 = vld [vmem:[%s204 + $0x170] sm:$0xff]
      %v329 = vld [vmem:[%s204 + $0x178] sm:$0xff]
      %v330 = vld [vmem:[%s204 + $0x180] sm:$0xff]
      %v331 = vld [vmem:[%s204 + $0x188] sm:$0xff]
      %v332 = vld [vmem:[%s204 + $0x190] sm:$0xff]
      %v333 = vld [vmem:[%s204 + $0x198] sm:$0xff]
      %v334 = vld [vmem:[%s204 + $0x1a0] sm:$0xff]
      %v335 = vld [vmem:[%s204 + $0x1a8] sm:$0xff]
      %v336 = vld [vmem:[%s204 + $0x1b0] sm:$0xff]
      %v337 = vld [vmem:[%s204 + $0x1b8] sm:$0xff]
      %v338 = vld [vmem:[%s204 + $0x1c0] sm:$0xff]
      %v339 = vld [vmem:[%s204 + $0x1c8] sm:$0xff]
      %v340 = vld [vmem:[%s204 + $0x1d0] sm:$0xff]
      %v341 = vld [vmem:[%s204 + $0x1d8] sm:$0xff]
      %v342 = vld [vmem:[%s204 + $0x1e0] sm:$0xff]
      %v343 = vld [vmem:[%s204 + $0x1e8] sm:$0xff]
      %v344 = vld [vmem:[%s204 + $0x1f0] sm:$0xff]
      %v345 = vld [vmem:[%s204 + $0x1f8] sm:$0xff]
      %v346 = vld [vmem:[%s210] sm:$0xff]
      %v347 = vld [vmem:[%s210 + $0x8] sm:$0xff]
      %v348 = vld [vmem:[%s210 + $0x10] sm:$0xff]
      %v349 = vld [vmem:[%s210 + $0x18] sm:$0xff]
      %v350 = vld [vmem:[%s210 + $0x20] sm:$0xff]
      %v351 = vld [vmem:[%s210 + $0x28] sm:$0xff]
      %v352 = vld [vmem:[%s210 + $0x30] sm:$0xff]
      %v353 = vld [vmem:[%s210 + $0x38] sm:$0xff]
      %v354 = vld [vmem:[%s210 + $0x40] sm:$0xff]
      %v355 = vld [vmem:[%s210 + $0x48] sm:$0xff]
      %v356 = vld [vmem:[%s210 + $0x50] sm:$0xff]
      %v357 = vld [vmem:[%s210 + $0x58] sm:$0xff]
      %v358 = vld [vmem:[%s210 + $0x60] sm:$0xff]
      %v359 = vld [vmem:[%s210 + $0x68] sm:$0xff]
      %v360 = vld [vmem:[%s210 + $0x70] sm:$0xff]
      %v361 = vld [vmem:[%s210 + $0x78] sm:$0xff]
      %v362 = vld [vmem:[%s210 + $0x80] sm:$0xff]
      %v363 = vld [vmem:[%s210 + $0x88] sm:$0xff]
      %v364 = vld [vmem:[%s210 + $0x90] sm:$0xff]
      %v365 = vld [vmem:[%s210 + $0x98] sm:$0xff]
      %v366 = vld [vmem:[%s210 + $0xa0] sm:$0xff]
      %v367 = vld [vmem:[%s210 + $0xa8] sm:$0xff]
      %v368 = vld [vmem:[%s210 + $0xb0] sm:$0xff]
      %v369 = vld [vmem:[%s210 + $0xb8] sm:$0xff]
      %v370 = vld [vmem:[%s210 + $0xc0] sm:$0xff]
      %v371 = vld [vmem:[%s210 + $0xc8] sm:$0xff]
      %v372 = vld [vmem:[%s210 + $0xd0] sm:$0xff]
      %v373 = vld [vmem:[%s210 + $0xd8] sm:$0xff]
      %v374 = vld [vmem:[%s210 + $0xe0] sm:$0xff]
      %v375 = vld [vmem:[%s210 + $0xe8] sm:$0xff]
      %v376 = vld [vmem:[%s210 + $0xf0] sm:$0xff]
      %v377 = vld [vmem:[%s210 + $0xf8] sm:$0xff]
      %v378 = vld [vmem:[%s210 + $0x100] sm:$0xff]
      %v379 = vld [vmem:[%s210 + $0x108] sm:$0xff]
      %v380 = vld [vmem:[%s210 + $0x110] sm:$0xff]
      %v381 = vld [vmem:[%s210 + $0x118] sm:$0xff]
      %v382 = vld [vmem:[%s210 + $0x120] sm:$0xff]
      %v383 = vld [vmem:[%s210 + $0x128] sm:$0xff]
      %v384 = vld [vmem:[%s210 + $0x130] sm:$0xff]
      %v385 = vld [vmem:[%s210 + $0x138] sm:$0xff]
      %v386 = vld [vmem:[%s210 + $0x140] sm:$0xff]
      %v387 = vld [vmem:[%s210 + $0x148] sm:$0xff]
      %v388 = vld [vmem:[%s210 + $0x150] sm:$0xff]
      %v389 = vld [vmem:[%s210 + $0x158] sm:$0xff]
      %v390 = vld [vmem:[%s210 + $0x160] sm:$0xff]
      %v391 = vld [vmem:[%s210 + $0x168] sm:$0xff]
      %v392 = vld [vmem:[%s210 + $0x170] sm:$0xff]
      %v393 = vld [vmem:[%s210 + $0x178] sm:$0xff]
      %v394 = vld [vmem:[%s210 + $0x180] sm:$0xff]
      %v395 = vld [vmem:[%s210 + $0x188] sm:$0xff]
      %v396 = vld [vmem:[%s210 + $0x190] sm:$0xff]
      %v397 = vld [vmem:[%s210 + $0x198] sm:$0xff]
      %v398 = vld [vmem:[%s210 + $0x1a0] sm:$0xff]
      %v399 = vld [vmem:[%s210 + $0x1a8] sm:$0xff]
      %v400 = vld [vmem:[%s210 + $0x1b0] sm:$0xff]
      %v401 = vld [vmem:[%s210 + $0x1b8] sm:$0xff]
      %v402 = vld [vmem:[%s210 + $0x1c0] sm:$0xff]
      %v403 = vld [vmem:[%s210 + $0x1c8] sm:$0xff]
      %v404 = vld [vmem:[%s210 + $0x1d0] sm:$0xff]
      %v405 = vld [vmem:[%s210 + $0x1d8] sm:$0xff]
      %v406 = vld [vmem:[%s210 + $0x1e0] sm:$0xff]
      %v407 = vld [vmem:[%s210 + $0x1e8] sm:$0xff]
      %v408 = vld [vmem:[%s210 + $0x1f0] sm:$0xff]
      %v409 = vld [vmem:[%s210 + $0x1f8] sm:$0xff]
      %v410 = vmul.f32 %v218, %v282
      %v411 = vmul.f32 %v219, %v283
      %v412 = vmul.f32 %v220, %v284
      %v413 = vmul.f32 %v221, %v285
      %v414 = vmul.f32 %v222, %v286
      %v415 = vmul.f32 %v223, %v287
      %v416 = vmul.f32 %v224, %v288
      %v417 = vmul.f32 %v225, %v289
      %v418 = vmul.f32 %v226, %v290
      %v419 = vmul.f32 %v227, %v291
      %v420 = vmul.f32 %v228, %v292
      %v421 = vmul.f32 %v229, %v293
      %v422 = vmul.f32 %v230, %v294
      %v423 = vmul.f32 %v231, %v295
      %v424 = vmul.f32 %v232, %v296
      %v425 = vmul.f32 %v233, %v297
      %v426 = vmul.f32 %v234, %v298
      %v427 = vmul.f32 %v235, %v299
      %v428 = vmul.f32 %v236, %v300
      %v429 = vmul.f32 %v237, %v301
      %v430 = vmul.f32 %v238, %v302
      %v431 = vmul.f32 %v239, %v303
      %v432 = vmul.f32 %v240, %v304
      %v433 = vmul.f32 %v241, %v305
      %v434 = vmul.f32 %v242, %v306
      %v435 = vmul.f32 %v243, %v307
      %v436 = vmul.f32 %v244, %v308
      %v437 = vmul.f32 %v245, %v309
      %v438 = vmul.f32 %v246, %v310
      %v439 = vmul.f32 %v247, %v311
      %v440 = vmul.f32 %v248, %v312
      %v441 = vmul.f32 %v249, %v313
      %v442 = vmul.f32 %v250, %v314
      %v443 = vmul.f32 %v251, %v315
      %v444 = vmul.f32 %v252, %v316
      %v445 = vmul.f32 %v253, %v317
      %v446 = vmul.f32 %v254, %v318
      %v447 = vmul.f32 %v255, %v319
      %v448 = vmul.f32 %v256, %v320
      %v449 = vmul.f32 %v257, %v321
      %v450 = vmul.f32 %v258, %v322
      %v451 = vmul.f32 %v259, %v323
      %v452 = vmul.f32 %v260, %v324
      %v453 = vmul.f32 %v261, %v325
      %v454 = vmul.f32 %v262, %v326
      %v455 = vmul.f32 %v263, %v327
      %v456 = vmul.f32 %v264, %v328
      %v457 = vmul.f32 %v265, %v329
      %v458 = vmul.f32 %v266, %v330
      %v459 = vmul.f32 %v267, %v331
      %v460 = vmul.f32 %v268, %v332
      %v461 = vmul.f32 %v269, %v333
      %v462 = vmul.f32 %v270, %v334
      %v463 = vmul.f32 %v271, %v335
      %v464 = vmul.f32 %v272, %v336
      %v465 = vmul.f32 %v273, %v337
      %v466 = vmul.f32 %v274, %v338
      %v467 = vmul.f32 %v275, %v339
      %v468 = vmul.f32 %v276, %v340
      %v469 = vmul.f32 %v277, %v341
      %v470 = vmul.f32 %v278, %v342
      %v471 = vmul.f32 %v279, %v343
      %v472 = vmul.f32 %v280, %v344
      %v473 = vmul.f32 %v281, %v345
      %vm474 = vcmask 523264
      %v475 = vsel %vm474, %v410, 0.0
      %476 = vadd.xlane.f32.xlu0 %v475
      %v477 = vpop.xlane.xlu0 %476
      %v478 = vsel %vm474, %v411, 0.0
      %479 = vadd.xlane.f32.xlu0 %v478
      %v480 = vpop.xlane.xlu0 %479
      %v481 = vsel %vm474, %v412, 0.0
      %482 = vadd.xlane.f32.xlu0 %v481
      %v483 = vpop.xlane.xlu0 %482
      %v484 = vsel %vm474, %v413, 0.0
      %485 = vadd.xlane.f32.xlu0 %v484
      %v486 = vpop.xlane.xlu0 %485
      %v487 = vsel %vm474, %v414, 0.0
      %488 = vadd.xlane.f32.xlu0 %v487
      %v489 = vpop.xlane.xlu0 %488
      %v490 = vsel %vm474, %v415, 0.0
      %491 = vadd.xlane.f32.xlu0 %v490
      %v492 = vpop.xlane.xlu0 %491
      %v493 = vsel %vm474, %v416, 0.0
      %494 = vadd.xlane.f32.xlu0 %v493
      %v495 = vpop.xlane.xlu0 %494
      %v496 = vsel %vm474, %v417, 0.0
      %497 = vadd.xlane.f32.xlu0 %v496
      %v498 = vpop.xlane.xlu0 %497
      %v499 = vsel %vm474, %v418, 0.0
      %500 = vadd.xlane.f32.xlu0 %v499
      %v501 = vpop.xlane.xlu0 %500
      %v502 = vsel %vm474, %v419, 0.0
      %503 = vadd.xlane.f32.xlu0 %v502
      %v504 = vpop.xlane.xlu0 %503
      %v505 = vsel %vm474, %v420, 0.0
      %506 = vadd.xlane.f32.xlu0 %v505
      %v507 = vpop.xlane.xlu0 %506
      %v508 = vsel %vm474, %v421, 0.0
      %509 = vadd.xlane.f32.xlu0 %v508
      %v510 = vpop.xlane.xlu0 %509
      %v511 = vsel %vm474, %v422, 0.0
      %512 = vadd.xlane.f32.xlu0 %v511
      %v513 = vpop.xlane.xlu0 %512
      %v514 = vsel %vm474, %v423, 0.0
      %515 = vadd.xlane.f32.xlu0 %v514
      %v516 = vpop.xlane.xlu0 %515
      %v517 = vsel %vm474, %v424, 0.0
      %518 = vadd.xlane.f32.xlu0 %v517
      %v519 = vpop.xlane.xlu0 %518
      %v520 = vsel %vm474, %v425, 0.0
      %521 = vadd.xlane.f32.xlu0 %v520
      %v522 = vpop.xlane.xlu0 %521
      %v523 = vsel %vm474, %v426, 0.0
      %524 = vadd.xlane.f32.xlu0 %v523
      %v525 = vpop.xlane.xlu0 %524
      %v526 = vsel %vm474, %v427, 0.0
      %527 = vadd.xlane.f32.xlu0 %v526
      %v528 = vpop.xlane.xlu0 %527
      %v529 = vsel %vm474, %v428, 0.0
      %530 = vadd.xlane.f32.xlu0 %v529
      %v531 = vpop.xlane.xlu0 %530
      %v532 = vsel %vm474, %v429, 0.0
      %533 = vadd.xlane.f32.xlu0 %v532
      %v534 = vpop.xlane.xlu0 %533
      %v535 = vsel %vm474, %v430, 0.0
      %536 = vadd.xlane.f32.xlu0 %v535
      %v537 = vpop.xlane.xlu0 %536
      %v538 = vsel %vm474, %v431, 0.0
      %539 = vadd.xlane.f32.xlu0 %v538
      %v540 = vpop.xlane.xlu0 %539
      %v541 = vsel %vm474, %v432, 0.0
      %542 = vadd.xlane.f32.xlu0 %v541
      %v543 = vpop.xlane.xlu0 %542
      %v544 = vsel %vm474, %v433, 0.0
      %545 = vadd.xlane.f32.xlu0 %v544
      %v546 = vpop.xlane.xlu0 %545
      %v547 = vsel %vm474, %v434, 0.0
      %548 = vadd.xlane.f32.xlu0 %v547
      %v549 = vpop.xlane.xlu0 %548
      %v550 = vsel %vm474, %v435, 0.0
      %551 = vadd.xlane.f32.xlu0 %v550
      %v552 = vpop.xlane.xlu0 %551
      %v553 = vsel %vm474, %v436, 0.0
      %554 = vadd.xlane.f32.xlu0 %v553
      %v555 = vpop.xlane.xlu0 %554
      %v556 = vsel %vm474, %v437, 0.0
      %557 = vadd.xlane.f32.xlu0 %v556
      %v558 = vpop.xlane.xlu0 %557
      %v559 = vsel %vm474, %v438, 0.0
      %560 = vadd.xlane.f32.xlu0 %v559
      %v561 = vpop.xlane.xlu0 %560
      %v562 = vsel %vm474, %v439, 0.0
      %563 = vadd.xlane.f32.xlu0 %v562
      %v564 = vpop.xlane.xlu0 %563
      %v565 = vsel %vm474, %v440, 0.0
      %566 = vadd.xlane.f32.xlu0 %v565
      %v567 = vpop.xlane.xlu0 %566
      %v568 = vsel %vm474, %v441, 0.0
      %569 = vadd.xlane.f32.xlu0 %v568
      %v570 = vpop.xlane.xlu0 %569
      %v571 = vsel %vm474, %v442, 0.0
      %572 = vadd.xlane.f32.xlu0 %v571
      %v573 = vpop.xlane.xlu0 %572
      %v574 = vsel %vm474, %v443, 0.0
      %575 = vadd.xlane.f32.xlu0 %v574
      %v576 = vpop.xlane.xlu0 %575
      %v577 = vsel %vm474, %v444, 0.0
      %578 = vadd.xlane.f32.xlu0 %v577
      %v579 = vpop.xlane.xlu0 %578
      %v580 = vsel %vm474, %v445, 0.0
      %581 = vadd.xlane.f32.xlu0 %v580
      %v582 = vpop.xlane.xlu0 %581
      %v583 = vsel %vm474, %v446, 0.0
      %584 = vadd.xlane.f32.xlu0 %v583
      %v585 = vpop.xlane.xlu0 %584
      %v586 = vsel %vm474, %v447, 0.0
      %587 = vadd.xlane.f32.xlu0 %v586
      %v588 = vpop.xlane.xlu0 %587
      %v589 = vsel %vm474, %v448, 0.0
      %590 = vadd.xlane.f32.xlu0 %v589
      %v591 = vpop.xlane.xlu0 %590
      %v592 = vsel %vm474, %v449, 0.0
      %593 = vadd.xlane.f32.xlu0 %v592
      %v594 = vpop.xlane.xlu0 %593
      %v595 = vsel %vm474, %v450, 0.0
      %596 = vadd.xlane.f32.xlu0 %v595
      %v597 = vpop.xlane.xlu0 %596
      %v598 = vsel %vm474, %v451, 0.0
      %599 = vadd.xlane.f32.xlu0 %v598
      %v600 = vpop.xlane.xlu0 %599
      %v601 = vsel %vm474, %v452, 0.0
      %602 = vadd.xlane.f32.xlu0 %v601
      %v603 = vpop.xlane.xlu0 %602
      %v604 = vsel %vm474, %v453, 0.0
      %605 = vadd.xlane.f32.xlu0 %v604
      %v606 = vpop.xlane.xlu0 %605
      %v607 = vsel %vm474, %v454, 0.0
      %608 = vadd.xlane.f32.xlu0 %v607
      %v609 = vpop.xlane.xlu0 %608
      %v610 = vsel %vm474, %v455, 0.0
      %611 = vadd.xlane.f32.xlu0 %v610
      %v612 = vpop.xlane.xlu0 %611
      %v613 = vsel %vm474, %v456, 0.0
      %614 = vadd.xlane.f32.xlu0 %v613
      %v615 = vpop.xlane.xlu0 %614
      %v616 = vsel %vm474, %v457, 0.0
      %617 = vadd.xlane.f32.xlu0 %v616
      %v618 = vpop.xlane.xlu0 %617
      %v619 = vsel %vm474, %v458, 0.0
      %620 = vadd.xlane.f32.xlu0 %v619
      %v621 = vpop.xlane.xlu0 %620
      %v622 = vsel %vm474, %v459, 0.0
      %623 = vadd.xlane.f32.xlu0 %v622
      %v624 = vpop.xlane.xlu0 %623
      %v625 = vsel %vm474, %v460, 0.0
      %626 = vadd.xlane.f32.xlu0 %v625
      %v627 = vpop.xlane.xlu0 %626
      %v628 = vsel %vm474, %v461, 0.0
      %629 = vadd.xlane.f32.xlu0 %v628
      %v630 = vpop.xlane.xlu0 %629
      %v631 = vsel %vm474, %v462, 0.0
      %632 = vadd.xlane.f32.xlu0 %v631
      %v633 = vpop.xlane.xlu0 %632
      %v634 = vsel %vm474, %v463, 0.0
      %635 = vadd.xlane.f32.xlu0 %v634
      %v636 = vpop.xlane.xlu0 %635
      %v637 = vsel %vm474, %v464, 0.0
      %638 = vadd.xlane.f32.xlu0 %v637
      %v639 = vpop.xlane.xlu0 %638
      %v640 = vsel %vm474, %v465, 0.0
      %641 = vadd.xlane.f32.xlu0 %v640
      %v642 = vpop.xlane.xlu0 %641
      %v643 = vsel %vm474, %v466, 0.0
      %644 = vadd.xlane.f32.xlu0 %v643
      %v645 = vpop.xlane.xlu0 %644
      %v646 = vsel %vm474, %v467, 0.0
      %647 = vadd.xlane.f32.xlu0 %v646
      %v648 = vpop.xlane.xlu0 %647
      %v649 = vsel %vm474, %v468, 0.0
      %650 = vadd.xlane.f32.xlu0 %v649
      %v651 = vpop.xlane.xlu0 %650
      %v652 = vsel %vm474, %v469, 0.0
      %653 = vadd.xlane.f32.xlu0 %v652
      %v654 = vpop.xlane.xlu0 %653
      %v655 = vsel %vm474, %v470, 0.0
      %656 = vadd.xlane.f32.xlu0 %v655
      %v657 = vpop.xlane.xlu0 %656
      %v658 = vsel %vm474, %v471, 0.0
      %659 = vadd.xlane.f32.xlu0 %v658
      %v660 = vpop.xlane.xlu0 %659
      %v661 = vsel %vm474, %v472, 0.0
      %662 = vadd.xlane.f32.xlu0 %v661
      %v663 = vpop.xlane.xlu0 %662
      %v664 = vsel %vm474, %v473, 0.0
      %665 = vadd.xlane.f32.xlu0 %v664
      %v666 = vpop.xlane.xlu0 %665
      %v667 = vmul.f32 %v346, %v346
      %v668 = vmul.f32 %v347, %v347
      %v669 = vmul.f32 %v348, %v348
      %v670 = vmul.f32 %v349, %v349
      %v671 = vmul.f32 %v350, %v350
      %v672 = vmul.f32 %v351, %v351
      %v673 = vmul.f32 %v352, %v352
      %v674 = vmul.f32 %v353, %v353
      %v675 = vmul.f32 %v354, %v354
      %v676 = vmul.f32 %v355, %v355
      %v677 = vmul.f32 %v356, %v356
      %v678 = vmul.f32 %v357, %v357
      %v679 = vmul.f32 %v358, %v358
      %v680 = vmul.f32 %v359, %v359
      %v681 = vmul.f32 %v360, %v360
      %v682 = vmul.f32 %v361, %v361
      %v683 = vmul.f32 %v362, %v362
      %v684 = vmul.f32 %v363, %v363
      %v685 = vmul.f32 %v364, %v364
      %v686 = vmul.f32 %v365, %v365
      %v687 = vmul.f32 %v366, %v366
      %v688 = vmul.f32 %v367, %v367
      %v689 = vmul.f32 %v368, %v368
      %v690 = vmul.f32 %v369, %v369
      %v691 = vmul.f32 %v370, %v370
      %v692 = vmul.f32 %v371, %v371
      %v693 = vmul.f32 %v372, %v372
      %v694 = vmul.f32 %v373, %v373
      %v695 = vmul.f32 %v374, %v374
      %v696 = vmul.f32 %v375, %v375
      %v697 = vmul.f32 %v376, %v376
      %v698 = vmul.f32 %v377, %v377
      %v699 = vmul.f32 %v378, %v378
      %v700 = vmul.f32 %v379, %v379
      %v701 = vmul.f32 %v380, %v380
      %v702 = vmul.f32 %v381, %v381
      %v703 = vmul.f32 %v382, %v382
      %v704 = vmul.f32 %v383, %v383
      %v705 = vmul.f32 %v384, %v384
      %v706 = vmul.f32 %v385, %v385
      %v707 = vmul.f32 %v386, %v386
      %v708 = vmul.f32 %v387, %v387
      %v709 = vmul.f32 %v388, %v388
      %v710 = vmul.f32 %v389, %v389
      %v711 = vmul.f32 %v390, %v390
      %v712 = vmul.f32 %v391, %v391
      %v713 = vmul.f32 %v392, %v392
      %v714 = vmul.f32 %v393, %v393
      %v715 = vmul.f32 %v394, %v394
      %v716 = vmul.f32 %v395, %v395
      %v717 = vmul.f32 %v396, %v396
      %v718 = vmul.f32 %v397, %v397
      %v719 = vmul.f32 %v398, %v398
      %v720 = vmul.f32 %v399, %v399
      %v721 = vmul.f32 %v400, %v400
      %v722 = vmul.f32 %v401, %v401
      %v723 = vmul.f32 %v402, %v402
      %v724 = vmul.f32 %v403, %v403
      %v725 = vmul.f32 %v404, %v404
      %v726 = vmul.f32 %v405, %v405
      %v727 = vmul.f32 %v406, %v406
      %v728 = vmul.f32 %v407, %v407
      %v729 = vmul.f32 %v408, %v408
      %v730 = vmul.f32 %v409, %v409
      %v731 = vsel %vm474, %v667, 0.0
      %732 = vadd.xlane.f32.xlu0 %v731
      %v733 = vpop.xlane.xlu0 %732
      %v734 = vsel %vm474, %v668, 0.0
      %735 = vadd.xlane.f32.xlu0 %v734
      %v736 = vpop.xlane.xlu0 %735
      %v737 = vsel %vm474, %v669, 0.0
      %738 = vadd.xlane.f32.xlu0 %v737
      %v739 = vpop.xlane.xlu0 %738
      %v740 = vsel %vm474, %v670, 0.0
      %741 = vadd.xlane.f32.xlu0 %v740
      %v742 = vpop.xlane.xlu0 %741
      %v743 = vsel %vm474, %v671, 0.0
      %744 = vadd.xlane.f32.xlu0 %v743
      %v745 = vpop.xlane.xlu0 %744
      %v746 = vsel %vm474, %v672, 0.0
      %747 = vadd.xlane.f32.xlu0 %v746
      %v748 = vpop.xlane.xlu0 %747
      %v749 = vsel %vm474, %v673, 0.0
      %750 = vadd.xlane.f32.xlu0 %v749
      %v751 = vpop.xlane.xlu0 %750
      %v752 = vsel %vm474, %v674, 0.0
      %753 = vadd.xlane.f32.xlu0 %v752
      %v754 = vpop.xlane.xlu0 %753
      %v755 = vsel %vm474, %v675, 0.0
      %756 = vadd.xlane.f32.xlu0 %v755
      %v757 = vpop.xlane.xlu0 %756
      %v758 = vsel %vm474, %v676, 0.0
      %759 = vadd.xlane.f32.xlu0 %v758
      %v760 = vpop.xlane.xlu0 %759
      %v761 = vsel %vm474, %v677, 0.0
      %762 = vadd.xlane.f32.xlu0 %v761
      %v763 = vpop.xlane.xlu0 %762
      %v764 = vsel %vm474, %v678, 0.0
      %765 = vadd.xlane.f32.xlu0 %v764
      %v766 = vpop.xlane.xlu0 %765
      %v767 = vsel %vm474, %v679, 0.0
      %768 = vadd.xlane.f32.xlu0 %v767
      %v769 = vpop.xlane.xlu0 %768
      %v770 = vsel %vm474, %v680, 0.0
      %771 = vadd.xlane.f32.xlu0 %v770
      %v772 = vpop.xlane.xlu0 %771
      %v773 = vsel %vm474, %v681, 0.0
      %774 = vadd.xlane.f32.xlu0 %v773
      %v775 = vpop.xlane.xlu0 %774
      %v776 = vsel %vm474, %v682, 0.0
      %777 = vadd.xlane.f32.xlu0 %v776
      %v778 = vpop.xlane.xlu0 %777
      %v779 = vsel %vm474, %v683, 0.0
      %780 = vadd.xlane.f32.xlu0 %v779
      %v781 = vpop.xlane.xlu0 %780
      %v782 = vsel %vm474, %v684, 0.0
      %783 = vadd.xlane.f32.xlu0 %v782
      %v784 = vpop.xlane.xlu0 %783
      %v785 = vsel %vm474, %v685, 0.0
      %786 = vadd.xlane.f32.xlu0 %v785
      %v787 = vpop.xlane.xlu0 %786
      %v788 = vsel %vm474, %v686, 0.0
      %789 = vadd.xlane.f32.xlu0 %v788
      %v790 = vpop.xlane.xlu0 %789
      %v791 = vsel %vm474, %v687, 0.0
      %792 = vadd.xlane.f32.xlu0 %v791
      %v793 = vpop.xlane.xlu0 %792
      %v794 = vsel %vm474, %v688, 0.0
      %795 = vadd.xlane.f32.xlu0 %v794
      %v796 = vpop.xlane.xlu0 %795
      %v797 = vsel %vm474, %v689, 0.0
      %798 = vadd.xlane.f32.xlu0 %v797
      %v799 = vpop.xlane.xlu0 %798
      %v800 = vsel %vm474, %v690, 0.0
      %801 = vadd.xlane.f32.xlu0 %v800
      %v802 = vpop.xlane.xlu0 %801
      %v803 = vsel %vm474, %v691, 0.0
      %804 = vadd.xlane.f32.xlu0 %v803
      %v805 = vpop.xlane.xlu0 %804
      %v806 = vsel %vm474, %v692, 0.0
      %807 = vadd.xlane.f32.xlu0 %v806
      %v808 = vpop.xlane.xlu0 %807
      %v809 = vsel %vm474, %v693, 0.0
      %810 = vadd.xlane.f32.xlu0 %v809
      %v811 = vpop.xlane.xlu0 %810
      %v812 = vsel %vm474, %v694, 0.0
      %813 = vadd.xlane.f32.xlu0 %v812
      %v814 = vpop.xlane.xlu0 %813
      %v815 = vsel %vm474, %v695, 0.0
      %816 = vadd.xlane.f32.xlu0 %v815
      %v817 = vpop.xlane.xlu0 %816
      %v818 = vsel %vm474, %v696, 0.0
      %819 = vadd.xlane.f32.xlu0 %v818
      %v820 = vpop.xlane.xlu0 %819
      %v821 = vsel %vm474, %v697, 0.0
      %822 = vadd.xlane.f32.xlu0 %v821
      %v823 = vpop.xlane.xlu0 %822
      %v824 = vsel %vm474, %v698, 0.0
      %825 = vadd.xlane.f32.xlu0 %v824
      %v826 = vpop.xlane.xlu0 %825
      %v827 = vsel %vm474, %v699, 0.0
      %828 = vadd.xlane.f32.xlu0 %v827
      %v829 = vpop.xlane.xlu0 %828
      %v830 = vsel %vm474, %v700, 0.0
      %831 = vadd.xlane.f32.xlu0 %v830
      %v832 = vpop.xlane.xlu0 %831
      %v833 = vsel %vm474, %v701, 0.0
      %834 = vadd.xlane.f32.xlu0 %v833
      %v835 = vpop.xlane.xlu0 %834
      %v836 = vsel %vm474, %v702, 0.0
      %837 = vadd.xlane.f32.xlu0 %v836
      %v838 = vpop.xlane.xlu0 %837
      %v839 = vsel %vm474, %v703, 0.0
      %840 = vadd.xlane.f32.xlu0 %v839
      %v841 = vpop.xlane.xlu0 %840
      %v842 = vsel %vm474, %v704, 0.0
      %843 = vadd.xlane.f32.xlu0 %v842
      %v844 = vpop.xlane.xlu0 %843
      %v845 = vsel %vm474, %v705, 0.0
      %846 = vadd.xlane.f32.xlu0 %v845
      %v847 = vpop.xlane.xlu0 %846
      %v848 = vsel %vm474, %v706, 0.0
      %849 = vadd.xlane.f32.xlu0 %v848
      %v850 = vpop.xlane.xlu0 %849
      %v851 = vsel %vm474, %v707, 0.0
      %852 = vadd.xlane.f32.xlu0 %v851
      %v853 = vpop.xlane.xlu0 %852
      %v854 = vsel %vm474, %v708, 0.0
      %855 = vadd.xlane.f32.xlu0 %v854
      %v856 = vpop.xlane.xlu0 %855
      %v857 = vsel %vm474, %v709, 0.0
      %858 = vadd.xlane.f32.xlu0 %v857
      %v859 = vpop.xlane.xlu0 %858
      %v860 = vsel %vm474, %v710, 0.0
      %861 = vadd.xlane.f32.xlu0 %v860
      %v862 = vpop.xlane.xlu0 %861
      %v863 = vsel %vm474, %v711, 0.0
      %864 = vadd.xlane.f32.xlu0 %v863
      %v865 = vpop.xlane.xlu0 %864
      %v866 = vsel %vm474, %v712, 0.0
      %867 = vadd.xlane.f32.xlu0 %v866
      %v868 = vpop.xlane.xlu0 %867
      %v869 = vsel %vm474, %v713, 0.0
      %870 = vadd.xlane.f32.xlu0 %v869
      %v871 = vpop.xlane.xlu0 %870
      %v872 = vsel %vm474, %v714, 0.0
      %873 = vadd.xlane.f32.xlu0 %v872
      %v874 = vpop.xlane.xlu0 %873
      %v875 = vsel %vm474, %v715, 0.0
      %876 = vadd.xlane.f32.xlu0 %v875
      %v877 = vpop.xlane.xlu0 %876
      %v878 = vsel %vm474, %v716, 0.0
      %879 = vadd.xlane.f32.xlu0 %v878
      %v880 = vpop.xlane.xlu0 %879
      %v881 = vsel %vm474, %v717, 0.0
      %882 = vadd.xlane.f32.xlu0 %v881
      %v883 = vpop.xlane.xlu0 %882
      %v884 = vsel %vm474, %v718, 0.0
      %885 = vadd.xlane.f32.xlu0 %v884
      %v886 = vpop.xlane.xlu0 %885
      %v887 = vsel %vm474, %v719, 0.0
      %888 = vadd.xlane.f32.xlu0 %v887
      %v889 = vpop.xlane.xlu0 %888
      %v890 = vsel %vm474, %v720, 0.0
      %891 = vadd.xlane.f32.xlu0 %v890
      %v892 = vpop.xlane.xlu0 %891
      %v893 = vsel %vm474, %v721, 0.0
      %894 = vadd.xlane.f32.xlu0 %v893
      %v895 = vpop.xlane.xlu0 %894
      %v896 = vsel %vm474, %v722, 0.0
      %897 = vadd.xlane.f32.xlu0 %v896
      %v898 = vpop.xlane.xlu0 %897
      %v899 = vsel %vm474, %v723, 0.0
      %900 = vadd.xlane.f32.xlu0 %v899
      %v901 = vpop.xlane.xlu0 %900
      %v902 = vsel %vm474, %v724, 0.0
      %903 = vadd.xlane.f32.xlu0 %v902
      %v904 = vpop.xlane.xlu0 %903
      %v905 = vsel %vm474, %v725, 0.0
      %906 = vadd.xlane.f32.xlu0 %v905
      %v907 = vpop.xlane.xlu0 %906
      %v908 = vsel %vm474, %v726, 0.0
      %909 = vadd.xlane.f32.xlu0 %v908
      %v910 = vpop.xlane.xlu0 %909
      %v911 = vsel %vm474, %v727, 0.0
      %912 = vadd.xlane.f32.xlu0 %v911
      %v913 = vpop.xlane.xlu0 %912
      %v914 = vsel %vm474, %v728, 0.0
      %915 = vadd.xlane.f32.xlu0 %v914
      %v916 = vpop.xlane.xlu0 %915
      %v917 = vsel %vm474, %v729, 0.0
      %918 = vadd.xlane.f32.xlu0 %v917
      %v919 = vpop.xlane.xlu0 %918
      %v920 = vsel %vm474, %v730, 0.0
      %921 = vadd.xlane.f32.xlu0 %v920
      %v922 = vpop.xlane.xlu0 %921
      %v923 = vsub.f32 1.0, %v733
      %v924 = vsub.f32 1.0, %v736
      %v925 = vsub.f32 1.0, %v739
      %v926 = vsub.f32 1.0, %v742
      %v927 = vsub.f32 1.0, %v745
      %v928 = vsub.f32 1.0, %v748
      %v929 = vsub.f32 1.0, %v751
      %v930 = vsub.f32 1.0, %v754
      %v931 = vsub.f32 1.0, %v757
      %v932 = vsub.f32 1.0, %v760
      %v933 = vsub.f32 1.0, %v763
      %v934 = vsub.f32 1.0, %v766
      %v935 = vsub.f32 1.0, %v769
      %v936 = vsub.f32 1.0, %v772
      %v937 = vsub.f32 1.0, %v775
      %v938 = vsub.f32 1.0, %v778
      %v939 = vsub.f32 1.0, %v781
      %v940 = vsub.f32 1.0, %v784
      %v941 = vsub.f32 1.0, %v787
      %v942 = vsub.f32 1.0, %v790
      %v943 = vsub.f32 1.0, %v793
      %v944 = vsub.f32 1.0, %v796
      %v945 = vsub.f32 1.0, %v799
      %v946 = vsub.f32 1.0, %v802
      %v947 = vsub.f32 1.0, %v805
      %v948 = vsub.f32 1.0, %v808
      %v949 = vsub.f32 1.0, %v811
      %v950 = vsub.f32 1.0, %v814
      %v951 = vsub.f32 1.0, %v817
      %v952 = vsub.f32 1.0, %v820
      %v953 = vsub.f32 1.0, %v823
      %v954 = vsub.f32 1.0, %v826
      %v955 = vsub.f32 1.0, %v829
      %v956 = vsub.f32 1.0, %v832
      %v957 = vsub.f32 1.0, %v835
      %v958 = vsub.f32 1.0, %v838
      %v959 = vsub.f32 1.0, %v841
      %v960 = vsub.f32 1.0, %v844
      %v961 = vsub.f32 1.0, %v847
      %v962 = vsub.f32 1.0, %v850
      %v963 = vsub.f32 1.0, %v853
      %v964 = vsub.f32 1.0, %v856
      %v965 = vsub.f32 1.0, %v859
      %v966 = vsub.f32 1.0, %v862
      %v967 = vsub.f32 1.0, %v865
      %v968 = vsub.f32 1.0, %v868
      %v969 = vsub.f32 1.0, %v871
      %v970 = vsub.f32 1.0, %v874
      %v971 = vsub.f32 1.0, %v877
      %v972 = vsub.f32 1.0, %v880
      %v973 = vsub.f32 1.0, %v883
      %v974 = vsub.f32 1.0, %v886
      %v975 = vsub.f32 1.0, %v889
      %v976 = vsub.f32 1.0, %v892
      %v977 = vsub.f32 1.0, %v895
      %v978 = vsub.f32 1.0, %v898
      %v979 = vsub.f32 1.0, %v901
      %v980 = vsub.f32 1.0, %v904
      %v981 = vsub.f32 1.0, %v907
      %v982 = vsub.f32 1.0, %v910
      %v983 = vsub.f32 1.0, %v913
      %v984 = vsub.f32 1.0, %v916
      %v985 = vsub.f32 1.0, %v919
      %v986 = vsub.f32 1.0, %v922
      %v987 = vmul.f32 %v923, %v923
      %v988 = vmul.f32 %v924, %v924
      %v989 = vmul.f32 %v925, %v925
      %v990 = vmul.f32 %v926, %v926
      %v991 = vmul.f32 %v927, %v927
      %v992 = vmul.f32 %v928, %v928
      %v993 = vmul.f32 %v929, %v929
      %v994 = vmul.f32 %v930, %v930
      %v995 = vmul.f32 %v931, %v931
      %v996 = vmul.f32 %v932, %v932
      %v997 = vmul.f32 %v933, %v933
      %v998 = vmul.f32 %v934, %v934
      %v999 = vmul.f32 %v935, %v935
      %v1000 = vmul.f32 %v936, %v936
      %v1001 = vmul.f32 %v937, %v937
      %v1002 = vmul.f32 %v938, %v938
      %v1003 = vmul.f32 %v939, %v939
      %v1004 = vmul.f32 %v940, %v940
      %v1005 = vmul.f32 %v941, %v941
      %v1006 = vmul.f32 %v942, %v942
      %v1007 = vmul.f32 %v943, %v943
      %v1008 = vmul.f32 %v944, %v944
      %v1009 = vmul.f32 %v945, %v945
      %v1010 = vmul.f32 %v946, %v946
      %v1011 = vmul.f32 %v947, %v947
      %v1012 = vmul.f32 %v948, %v948
      %v1013 = vmul.f32 %v949, %v949
      %v1014 = vmul.f32 %v950, %v950
      %v1015 = vmul.f32 %v951, %v951
      %v1016 = vmul.f32 %v952, %v952
      %v1017 = vmul.f32 %v953, %v953
      %v1018 = vmul.f32 %v954, %v954
      %v1019 = vmul.f32 %v955, %v955
      %v1020 = vmul.f32 %v956, %v956
      %v1021 = vmul.f32 %v957, %v957
      %v1022 = vmul.f32 %v958, %v958
      %v1023 = vmul.f32 %v959, %v959
      %v1024 = vmul.f32 %v960, %v960
      %v1025 = vmul.f32 %v961, %v961
      %v1026 = vmul.f32 %v962, %v962
      %v1027 = vmul.f32 %v963, %v963
      %v1028 = vmul.f32 %v964, %v964
      %v1029 = vmul.f32 %v965, %v965
      %v1030 = vmul.f32 %v966, %v966
      %v1031 = vmul.f32 %v967, %v967
      %v1032 = vmul.f32 %v968, %v968
      %v1033 = vmul.f32 %v969, %v969
      %v1034 = vmul.f32 %v970, %v970
      %v1035 = vmul.f32 %v971, %v971
      %v1036 = vmul.f32 %v972, %v972
      %v1037 = vmul.f32 %v973, %v973
      %v1038 = vmul.f32 %v974, %v974
      %v1039 = vmul.f32 %v975, %v975
      %v1040 = vmul.f32 %v976, %v976
      %v1041 = vmul.f32 %v977, %v977
      %v1042 = vmul.f32 %v978, %v978
      %v1043 = vmul.f32 %v979, %v979
      %v1044 = vmul.f32 %v980, %v980
      %v1045 = vmul.f32 %v981, %v981
      %v1046 = vmul.f32 %v982, %v982
      %v1047 = vmul.f32 %v983, %v983
      %v1048 = vmul.f32 %v984, %v984
      %v1049 = vmul.f32 %v985, %v985
      %v1050 = vmul.f32 %v986, %v986
      %v1051 = vmul.f32 %v477, 4.0
      %v1052 = vmul.f32 %v480, 4.0
      %v1053 = vmul.f32 %v483, 4.0
      %v1054 = vmul.f32 %v486, 4.0
      %v1055 = vmul.f32 %v489, 4.0
      %v1056 = vmul.f32 %v492, 4.0
      %v1057 = vmul.f32 %v495, 4.0
      %v1058 = vmul.f32 %v498, 4.0
      %v1059 = vmul.f32 %v501, 4.0
      %v1060 = vmul.f32 %v504, 4.0
      %v1061 = vmul.f32 %v507, 4.0
      %v1062 = vmul.f32 %v510, 4.0
      %v1063 = vmul.f32 %v513, 4.0
      %v1064 = vmul.f32 %v516, 4.0
      %v1065 = vmul.f32 %v519, 4.0
      %v1066 = vmul.f32 %v522, 4.0
      %v1067 = vmul.f32 %v525, 4.0
      %v1068 = vmul.f32 %v528, 4.0
      %v1069 = vmul.f32 %v531, 4.0
      %v1070 = vmul.f32 %v534, 4.0
      %v1071 = vmul.f32 %v537, 4.0
      %v1072 = vmul.f32 %v540, 4.0
      %v1073 = vmul.f32 %v543, 4.0
      %v1074 = vmul.f32 %v546, 4.0
      %v1075 = vmul.f32 %v549, 4.0
      %v1076 = vmul.f32 %v552, 4.0
      %v1077 = vmul.f32 %v555, 4.0
      %v1078 = vmul.f32 %v558, 4.0
      %v1079 = vmul.f32 %v561, 4.0
      %v1080 = vmul.f32 %v564, 4.0
      %v1081 = vmul.f32 %v567, 4.0
      %v1082 = vmul.f32 %v570, 4.0
      %v1083 = vmul.f32 %v573, 4.0
      %v1084 = vmul.f32 %v576, 4.0
      %v1085 = vmul.f32 %v579, 4.0
      %v1086 = vmul.f32 %v582, 4.0
      %v1087 = vmul.f32 %v585, 4.0
      %v1088 = vmul.f32 %v588, 4.0
      %v1089 = vmul.f32 %v591, 4.0
      %v1090 = vmul.f32 %v594, 4.0
      %v1091 = vmul.f32 %v597, 4.0
      %v1092 = vmul.f32 %v600, 4.0
      %v1093 = vmul.f32 %v603, 4.0
      %v1094 = vmul.f32 %v606, 4.0
      %v1095 = vmul.f32 %v609, 4.0
      %v1096 = vmul.f32 %v612, 4.0
      %v1097 = vmul.f32 %v615, 4.0
      %v1098 = vmul.f32 %v618, 4.0
      %v1099 = vmul.f32 %v621, 4.0
      %v1100 = vmul.f32 %v624, 4.0
      %v1101 = vmul.f32 %v627, 4.0
      %v1102 = vmul.f32 %v630, 4.0
      %v1103 = vmul.f32 %v633, 4.0
      %v1104 = vmul.f32 %v636, 4.0
      %v1105 = vmul.f32 %v639, 4.0
      %v1106 = vmul.f32 %v642, 4.0
      %v1107 = vmul.f32 %v645, 4.0
      %v1108 = vmul.f32 %v648, 4.0
      %v1109 = vmul.f32 %v651, 4.0
      %v1110 = vmul.f32 %v654, 4.0
      %v1111 = vmul.f32 %v657, 4.0
      %v1112 = vmul.f32 %v660, 4.0
      %v1113 = vmul.f32 %v663, 4.0
      %v1114 = vmul.f32 %v666, 4.0
      %v1115 = vrcp.pop %v987
      %v1116 = vrcp.pop %v988
      %v1117 = vrcp.pop %v989
      %v1118 = vrcp.pop %v990
      %v1119 = vrcp.pop %v991
      %v1120 = vrcp.pop %v992
      %v1121 = vrcp.pop %v993
      %v1122 = vrcp.pop %v994
      %v1123 = vrcp.pop %v995
      %v1124 = vrcp.pop %v996
      %v1125 = vrcp.pop %v997
      %v1126 = vrcp.pop %v998
      %v1127 = vrcp.pop %v999
      %v1128 = vrcp.pop %v1000
      %v1129 = vrcp.pop %v1001
      %v1130 = vrcp.pop %v1002
      %v1131 = vrcp.pop %v1003
      %v1132 = vrcp.pop %v1004
      %v1133 = vrcp.pop %v1005
      %v1134 = vrcp.pop %v1006
      %v1135 = vrcp.pop %v1007
      %v1136 = vrcp.pop %v1008
      %v1137 = vrcp.pop %v1009
      %v1138 = vrcp.pop %v1010
      %v1139 = vrcp.pop %v1011
      %v1140 = vrcp.pop %v1012
      %v1141 = vrcp.pop %v1013
      %v1142 = vrcp.pop %v1014
      %v1143 = vrcp.pop %v1015
      %v1144 = vrcp.pop %v1016
      %v1145 = vrcp.pop %v1017
      %v1146 = vrcp.pop %v1018
      %v1147 = vrcp.pop %v1019
      %v1148 = vrcp.pop %v1020
      %v1149 = vrcp.pop %v1021
      %v1150 = vrcp.pop %v1022
      %v1151 = vrcp.pop %v1023
      %v1152 = vrcp.pop %v1024
      %v1153 = vrcp.pop %v1025
      %v1154 = vrcp.pop %v1026
      %v1155 = vrcp.pop %v1027
      %v1156 = vrcp.pop %v1028
      %v1157 = vrcp.pop %v1029
      %v1158 = vrcp.pop %v1030
      %v1159 = vrcp.pop %v1031
      %v1160 = vrcp.pop %v1032
      %v1161 = vrcp.pop %v1033
      %v1162 = vrcp.pop %v1034
      %v1163 = vrcp.pop %v1035
      %v1164 = vrcp.pop %v1036
      %v1165 = vrcp.pop %v1037
      %v1166 = vrcp.pop %v1038
      %v1167 = vrcp.pop %v1039
      %v1168 = vrcp.pop %v1040
      %v1169 = vrcp.pop %v1041
      %v1170 = vrcp.pop %v1042
      %v1171 = vrcp.pop %v1043
      %v1172 = vrcp.pop %v1044
      %v1173 = vrcp.pop %v1045
      %v1174 = vrcp.pop %v1046
      %v1175 = vrcp.pop %v1047
      %v1176 = vrcp.pop %v1048
      %v1177 = vrcp.pop %v1049
      %v1178 = vrcp.pop %v1050
      %v1179 = vmul.f32 %v1051, %v1115
      %v1180 = vmul.f32 %v1052, %v1116
      %v1181 = vmul.f32 %v1053, %v1117
      %v1182 = vmul.f32 %v1054, %v1118
      %v1183 = vmul.f32 %v1055, %v1119
      %v1184 = vmul.f32 %v1056, %v1120
      %v1185 = vmul.f32 %v1057, %v1121
      %v1186 = vmul.f32 %v1058, %v1122
      %v1187 = vmul.f32 %v1059, %v1123
      %v1188 = vmul.f32 %v1060, %v1124
      %v1189 = vmul.f32 %v1061, %v1125
      %v1190 = vmul.f32 %v1062, %v1126
      %v1191 = vmul.f32 %v1063, %v1127
      %v1192 = vmul.f32 %v1064, %v1128
      %v1193 = vmul.f32 %v1065, %v1129
      %v1194 = vmul.f32 %v1066, %v1130
      %v1195 = vmul.f32 %v1067, %v1131
      %v1196 = vmul.f32 %v1068, %v1132
      %v1197 = vmul.f32 %v1069, %v1133
      %v1198 = vmul.f32 %v1070, %v1134
      %v1199 = vmul.f32 %v1071, %v1135
      %v1200 = vmul.f32 %v1072, %v1136
      %v1201 = vmul.f32 %v1073, %v1137
      %v1202 = vmul.f32 %v1074, %v1138
      %v1203 = vmul.f32 %v1075, %v1139
      %v1204 = vmul.f32 %v1076, %v1140
      %v1205 = vmul.f32 %v1077, %v1141
      %v1206 = vmul.f32 %v1078, %v1142
      %v1207 = vmul.f32 %v1079, %v1143
      %v1208 = vmul.f32 %v1080, %v1144
      %v1209 = vmul.f32 %v1081, %v1145
      %v1210 = vmul.f32 %v1082, %v1146
      %v1211 = vmul.f32 %v1083, %v1147
      %v1212 = vmul.f32 %v1084, %v1148
      %v1213 = vmul.f32 %v1085, %v1149
      %v1214 = vmul.f32 %v1086, %v1150
      %v1215 = vmul.f32 %v1087, %v1151
      %v1216 = vmul.f32 %v1088, %v1152
      %v1217 = vmul.f32 %v1089, %v1153
      %v1218 = vmul.f32 %v1090, %v1154
      %v1219 = vmul.f32 %v1091, %v1155
      %v1220 = vmul.f32 %v1092, %v1156
      %v1221 = vmul.f32 %v1093, %v1157
      %v1222 = vmul.f32 %v1094, %v1158
      %v1223 = vmul.f32 %v1095, %v1159
      %v1224 = vmul.f32 %v1096, %v1160
      %v1225 = vmul.f32 %v1097, %v1161
      %v1226 = vmul.f32 %v1098, %v1162
      %v1227 = vmul.f32 %v1099, %v1163
      %v1228 = vmul.f32 %v1100, %v1164
      %v1229 = vmul.f32 %v1101, %v1165
      %v1230 = vmul.f32 %v1102, %v1166
      %v1231 = vmul.f32 %v1103, %v1167
      %v1232 = vmul.f32 %v1104, %v1168
      %v1233 = vmul.f32 %v1105, %v1169
      %v1234 = vmul.f32 %v1106, %v1170
      %v1235 = vmul.f32 %v1107, %v1171
      %v1236 = vmul.f32 %v1108, %v1172
      %v1237 = vmul.f32 %v1109, %v1173
      %v1238 = vmul.f32 %v1110, %v1174
      %v1239 = vmul.f32 %v1111, %v1175
      %v1240 = vmul.f32 %v1112, %v1176
      %v1241 = vmul.f32 %v1113, %v1177
      %v1242 = vmul.f32 %v1114, %v1178
      %vm1243 = vcmask 7168
      %1244 = vst.msk [vmem:[%s216] sm:$0xff] %vm1243, %v1179
      %1245 = vst.msk [vmem:[%s216 + $0x8] sm:$0xff] %vm1243, %v1180
      %1246 = vst.msk [vmem:[%s216 + $0x10] sm:$0xff] %vm1243, %v1181
      %1247 = vst.msk [vmem:[%s216 + $0x18] sm:$0xff] %vm1243, %v1182
      %1248 = vst.msk [vmem:[%s216 + $0x20] sm:$0xff] %vm1243, %v1183
      %1249 = vst.msk [vmem:[%s216 + $0x28] sm:$0xff] %vm1243, %v1184
      %1250 = vst.msk [vmem:[%s216 + $0x30] sm:$0xff] %vm1243, %v1185
      %1251 = vst.msk [vmem:[%s216 + $0x38] sm:$0xff] %vm1243, %v1186
      %1252 = vst.msk [vmem:[%s216 + $0x40] sm:$0xff] %vm1243, %v1187
      %1253 = vst.msk [vmem:[%s216 + $0x48] sm:$0xff] %vm1243, %v1188
      %1254 = vst.msk [vmem:[%s216 + $0x50] sm:$0xff] %vm1243, %v1189
      %1255 = vst.msk [vmem:[%s216 + $0x58] sm:$0xff] %vm1243, %v1190
      %1256 = vst.msk [vmem:[%s216 + $0x60] sm:$0xff] %vm1243, %v1191
      %1257 = vst.msk [vmem:[%s216 + $0x68] sm:$0xff] %vm1243, %v1192
      %1258 = vst.msk [vmem:[%s216 + $0x70] sm:$0xff] %vm1243, %v1193
      %1259 = vst.msk [vmem:[%s216 + $0x78] sm:$0xff] %vm1243, %v1194
      %1260 = vst.msk [vmem:[%s216 + $0x80] sm:$0xff] %vm1243, %v1195
      %1261 = vst.msk [vmem:[%s216 + $0x88] sm:$0xff] %vm1243, %v1196
      %1262 = vst.msk [vmem:[%s216 + $0x90] sm:$0xff] %vm1243, %v1197
      %1263 = vst.msk [vmem:[%s216 + $0x98] sm:$0xff] %vm1243, %v1198
      %1264 = vst.msk [vmem:[%s216 + $0xa0] sm:$0xff] %vm1243, %v1199
      %1265 = vst.msk [vmem:[%s216 + $0xa8] sm:$0xff] %vm1243, %v1200
      %1266 = vst.msk [vmem:[%s216 + $0xb0] sm:$0xff] %vm1243, %v1201
      %1267 = vst.msk [vmem:[%s216 + $0xb8] sm:$0xff] %vm1243, %v1202
      %1268 = vst.msk [vmem:[%s216 + $0xc0] sm:$0xff] %vm1243, %v1203
      %1269 = vst.msk [vmem:[%s216 + $0xc8] sm:$0xff] %vm1243, %v1204
      %1270 = vst.msk [vmem:[%s216 + $0xd0] sm:$0xff] %vm1243, %v1205
      %1271 = vst.msk [vmem:[%s216 + $0xd8] sm:$0xff] %vm1243, %v1206
      %1272 = vst.msk [vmem:[%s216 + $0xe0] sm:$0xff] %vm1243, %v1207
      %1273 = vst.msk [vmem:[%s216 + $0xe8] sm:$0xff] %vm1243, %v1208
      %1274 = vst.msk [vmem:[%s216 + $0xf0] sm:$0xff] %vm1243, %v1209
      %1275 = vst.msk [vmem:[%s216 + $0xf8] sm:$0xff] %vm1243, %v1210
      %1276 = vst.msk [vmem:[%s216 + $0x100] sm:$0xff] %vm1243, %v1211
      %1277 = vst.msk [vmem:[%s216 + $0x108] sm:$0xff] %vm1243, %v1212
      %1278 = vst.msk [vmem:[%s216 + $0x110] sm:$0xff] %vm1243, %v1213
      %1279 = vst.msk [vmem:[%s216 + $0x118] sm:$0xff] %vm1243, %v1214
      %1280 = vst.msk [vmem:[%s216 + $0x120] sm:$0xff] %vm1243, %v1215
      %1281 = vst.msk [vmem:[%s216 + $0x128] sm:$0xff] %vm1243, %v1216
      %1282 = vst.msk [vmem:[%s216 + $0x130] sm:$0xff] %vm1243, %v1217
      %1283 = vst.msk [vmem:[%s216 + $0x138] sm:$0xff] %vm1243, %v1218
      %1284 = vst.msk [vmem:[%s216 + $0x140] sm:$0xff] %vm1243, %v1219
      %1285 = vst.msk [vmem:[%s216 + $0x148] sm:$0xff] %vm1243, %v1220
      %1286 = vst.msk [vmem:[%s216 + $0x150] sm:$0xff] %vm1243, %v1221
      %1287 = vst.msk [vmem:[%s216 + $0x158] sm:$0xff] %vm1243, %v1222
      %1288 = vst.msk [vmem:[%s216 + $0x160] sm:$0xff] %vm1243, %v1223
      %1289 = vst.msk [vmem:[%s216 + $0x168] sm:$0xff] %vm1243, %v1224
      %1290 = vst.msk [vmem:[%s216 + $0x170] sm:$0xff] %vm1243, %v1225
      %1291 = vst.msk [vmem:[%s216 + $0x178] sm:$0xff] %vm1243, %v1226
      %1292 = vst.msk [vmem:[%s216 + $0x180] sm:$0xff] %vm1243, %v1227
      %1293 = vst.msk [vmem:[%s216 + $0x188] sm:$0xff] %vm1243, %v1228
      %1294 = vst.msk [vmem:[%s216 + $0x190] sm:$0xff] %vm1243, %v1229
      %1295 = vst.msk [vmem:[%s216 + $0x198] sm:$0xff] %vm1243, %v1230
      %1296 = vst.msk [vmem:[%s216 + $0x1a0] sm:$0xff] %vm1243, %v1231
      %1297 = vst.msk [vmem:[%s216 + $0x1a8] sm:$0xff] %vm1243, %v1232
      %1298 = vst.msk [vmem:[%s216 + $0x1b0] sm:$0xff] %vm1243, %v1233
      %1299 = vst.msk [vmem:[%s216 + $0x1b8] sm:$0xff] %vm1243, %v1234
      %1300 = vst.msk [vmem:[%s216 + $0x1c0] sm:$0xff] %vm1243, %v1235
      %1301 = vst.msk [vmem:[%s216 + $0x1c8] sm:$0xff] %vm1243, %v1236
      %1302 = vst.msk [vmem:[%s216 + $0x1d0] sm:$0xff] %vm1243, %v1237
      %1303 = vst.msk [vmem:[%s216 + $0x1d8] sm:$0xff] %vm1243, %v1238
      %1304 = vst.msk [vmem:[%s216 + $0x1e0] sm:$0xff] %vm1243, %v1239
      %1305 = vst.msk [vmem:[%s216 + $0x1e8] sm:$0xff] %vm1243, %v1240
      %1306 = vst.msk [vmem:[%s216 + $0x1f0] sm:$0xff] %vm1243, %v1241
      %1307 = vst.msk [vmem:[%s216 + $0x1f8] sm:$0xff] %vm1243, %v1242
      %s1308 = smul.u32 64, %s14
      %p1309 = scmp.lt.s32.totalorder %s1308, 255
      %s1310 = scalar_select %p1309, %s1308, 255
      %s1311 = smul.addr %s1310, 8
      %s1312 = scalar_lea.vmem %s3, %s1311
      // Predicated region
      $region33: #{tpu_custom_call.1} parent=31 // pred_check
        %p1313 = pneg %p110
      $region34: #{tpu_custom_call.1} parent=31 // pred_check_branch
        %1315 = sbr.rel (%p1313) target = $region36
      $region35: #{tpu_custom_call.1} parent=31 // pred_region
        %s1316 = smul.u32 64, %s14
      $region36: #{tpu_custom_call.1} parent=31 // pred_fallthru
        _
    $region32: #{tpu_custom_call.1} parent=5 // pred_fallthru
      _
    %p1317 = scmp.le.s32.totalorder 2, %s9
    // Predicated region
    $region37: #{tpu_custom_call.1} parent=5 // pred_check
      %p1318 = pneg %p1317
    $region38: #{tpu_custom_call.1} parent=5 // pred_check_branch
      %1320 = sbr.rel (%p1318) target = $region40
    $region39: #{tpu_custom_call.1} parent=5 // pred_region
      %s1321 = ssub.s32 %s9, 2
      // Predicated region
      $region41: #{tpu_custom_call.1} parent=39 // pred_check
        %p1322 = pneg %p116
      $region42: #{tpu_custom_call.1} parent=39 // pred_check_branch
        %1324 = sbr.rel (%p1322) target = $region44
      $region43: #{tpu_custom_call.1} parent=39 // pred_region
        %s1325 = smul.u32 64, %s15
        %p1326 = scmp.lt.s32.totalorder %s1325, 255
        %s1327 = scalar_select %p1326, %s1325, 255
        %s1328 = smul.addr %s1327, 8
        %s1329 = scalar_lea.vmem %s3, %s1328
      $region44: #{tpu_custom_call.1} parent=39 // pred_fallthru
        _
    $region40: #{tpu_custom_call.1} parent=5 // pred_fallthru
      _
  $region6: #{tpu_custom_call.1} parent=0 // loop_footer
    %s13 = sadd.s32 1, %s9
  $region7: #{tpu_custom_call.1} parent=0 // loop_footer_branch
    %8 = sbr.rel target = $region3
  $region8: #{tpu_custom_call.1} parent=0 // loop_exit
    _

</llo_original>
